<compile_context>
chip_gen: v7x
topology: tpu7x:2x2x1
jax: 0.10.0
libtpu: 0.0.40
codegen_flags: <defaults>
</compile_context>

<pallas_src>
import jax
import jax.numpy as jnp
from jax.experimental import pallas as pl
from jax.experimental.pallas import tpu as pltpu

_LANE = 128     # vreg lane width
_SUBLANE = 8    # f32 sublane count


def _round_up(x, m):
    return (x + m - 1) // m * m


def _nbytes(a):
    return a.size * a.dtype.itemsize


def _vmem_capacity_bytes():
    """Physical VMEM of the current TPU generation (fallback: v7x's 64 MiB)."""
    try:
        info = pltpu.get_tpu_info()
        for attr in ("vmem_capacity_bytes", "vmem_bytes", "vmem_size_bytes"):
            cap = getattr(info, attr, None)
            if cap:
                return int(cap)
    except Exception:
        pass
    return 64 << 20


def _choose_block_b(B, per_row_bytes, rows_budget_bytes):
    """Largest batch tile (multiple of 8, preferring multiples of 256) that fits the VMEM
    budget and, whenever B > 8, leaves >= 2 grid steps so the batch axis can shard across
    TensorCores (v7x megacore)."""
    Bp8 = _round_up(max(B, _SUBLANE), _SUBLANE)
    if Bp8 <= _SUBLANE:
        return _SUBLANE
    max_rows = max(_SUBLANE,
                   (rows_budget_bytes // max(per_row_bytes, 1)) // _SUBLANE * _SUBLANE)
    half = _round_up(pl.cdiv(Bp8, 2), _SUBLANE)   # guarantees >= 2 grid steps
    for cand in (1024, 512, 256, 128, 64, 32, 16, 8):
        if cand <= max_rows and cand <= half:
            return cand
    return _SUBLANE


def _mlp_kernel(x_ref, w1_ref, b1_ref, w2_ref, b2_ref, o_ref):
    """Fused MLP tile: out = relu(x @ W1 + b1) @ W2 + b2 (bf16 MXU inputs, f32 accumulate)."""
    x = x_ref[...].astype(jnp.bfloat16)                               # (TB, D_in) bf16
    h = jnp.dot(x, w1_ref[...], preferred_element_type=jnp.float32)   # f32 accumulator
    h = jnp.maximum(h + b1_ref[...], 0.0)                             # f32 bias + ReLU (VPU)
    out = jnp.dot(h.astype(jnp.bfloat16), w2_ref[...],
                  preferred_element_type=jnp.float32)
    o_ref[...] = (out + b2_ref[...]).astype(o_ref.dtype)              # un-padded writeback


def prepare_params(w1, b1, w2, b2):
    """One-time parameter prep: pad the hidden dim to the 128-lane width and cast weights to
    bf16 (MXU-native). Call once, outside the per-forward path, so each forward does not pay an
    extra HBM round trip over the weights.

    Padded hidden columns stay exactly zero through ReLU and the zero W2 rows, so results are
    unchanged. The output dim is left un-padded (small D_out => fewer writeback bytes)."""
    D_in, H = w1.shape
    H2, D_out = w2.shape
    assert H2 == H and b1.shape == (H,) and b2.shape == (D_out,)
    Hp = _round_up(H, _LANE)
    w1p = jnp.pad(w1.astype(jnp.bfloat16), ((0, 0), (0, Hp - H)))
    b1p = jnp.pad(b1.astype(jnp.float32), (0, Hp - H)).reshape(1, Hp)
    w2p = jnp.pad(w2.astype(jnp.bfloat16), ((0, Hp - H), (0, 0)))
    b2p = b2.astype(jnp.float32).reshape(1, D_out)
    return w1p, b1p, w2p, b2p


def neural_net_forward(x, params, *, block_b=None):
    """Two-layer MLP (torch NeuralNet.forward) as a fused Pallas TPU kernel.

    Args:
      x:      [B, D_in] float32 (or bfloat16) activations.
      params: output of prepare_params() (padded bf16 weights, f32 biases).
    Returns:
      [B, D_out] float32.
    """
    w1p, b1p, w2p, b2p = params
    B, D_in = x.shape
    assert w1p.shape[0] == D_in, (w1p.shape, D_in)
    Hp = w1p.shape[1]
    D_out = w2p.shape[1]

    # --- batch tiling (VMEM- and megacore-aware) -----------------------------------------
    vmem_cap = (_vmem_capacity_bytes() * 3) // 4            # ~75% of physical, per generation
    weight_bytes = _nbytes(w1p) + _nbytes(b1p) + _nbytes(w2p) + _nbytes(b2p)
    # double-buffered x tile + double-buffered out tile + f32 temporaries for h / out
    per_row_bytes = 2 * (D_in * x.dtype.itemsize + D_out * 4) + Hp * 4 + D_out * 4
    rows_budget = vmem_cap - 2 * weight_bytes - (2 << 20)
    if block_b is None:
        block_b = _choose_block_b(B, per_row_bytes, rows_budget)
    block_b = max(_SUBLANE, _round_up(block_b, _SUBLANE))
    # NOTE: if D_in / H grow so the resident bf16 weights approach the VMEM cap above, switch
    # to tiling the D_in contraction axis with an f32 accumulator instead of resident W1.

    Bp = _round_up(max(B, _SUBLANE), block_b)               # pad batch so every tile is full
    x_p = jnp.pad(x, ((0, Bp - B), (0, 0))) if Bp != B else x
    grid = (Bp // block_b,)

    # --- advisory cost estimate -----------------------------------------------------------
    flops = 2 * Bp * (D_in * Hp + Hp * D_out)
    bytes_accessed = _nbytes(x_p) + weight_bytes + Bp * D_out * 4
    cost = pl.CostEstimate(flops=flops, transcendentals=0, bytes_accessed=bytes_accessed)

    needed = 2 * weight_bytes + block_b * per_row_bytes + (4 << 20)
    vmem_limit = int(min(max(needed, 16 << 20), vmem_cap))

    out_shape = jax.ShapeDtypeStruct((Bp, D_out), jnp.float32)
    x_spec = pl.BlockSpec((block_b, D_in), lambda i: (i, 0))        # pipelined x tile
    out_spec = pl.BlockSpec((block_b, D_out), lambda i: (i, 0))     # un-padded, small writeback
    weight_shapes = (w1p.shape, b1p.shape, w2p.shape, b2p.shape)

    def resident_specs(single_buffer):
        # Constant index_map => fetched once and kept resident across all grid steps.
        if single_buffer:
            return [pl.BlockSpec(s, lambda i: (0, 0), pipeline_mode=pl.Buffered(1))
                    for s in weight_shapes]
        return [pl.BlockSpec(s, lambda i: (0, 0)) for s in weight_shapes]

    def run(single_buffer):
        return pl.pallas_call(
            _mlp_kernel,
            out_shape=out_shape,
            grid_spec=pltpu.PrefetchScalarGridSpec(
                num_scalar_prefetch=0,
                grid=grid,
                in_specs=[x_spec] + resident_specs(single_buffer),
                out_specs=out_spec,
            ),
            compiler_params=pltpu.CompilerParams(
                dimension_semantics=("parallel",),
                vmem_limit_bytes=vmem_limit,
            ),
            cost_estimate=cost,
        )(x_p, w1p, b1p, w2p, b2p)

    try:
        out_padded = run(single_buffer=True)
    except Exception:
        # pl.Buffered(1) on a top-level pallas_call BlockSpec unsupported in this jax build:
        # fall back to default double-buffered resident weights (same numerics).
        out_padded = run(single_buffer=False)

    return out_padded if Bp == B else out_padded[:B]


def init_params(key, input_size, hidden_size, output_size):
    """Deterministic init mimicking torch.nn.Linear default (U[-1/sqrt(fan_in), 1/sqrt(fan_in)])."""
    k1, k2, k3, k4 = jax.random.split(key, 4)
    bound1 = 1.0 / jnp.sqrt(input_size)
    bound2 = 1.0 / jnp.sqrt(hidden_size)
    # Stored as [in, out] (transposed relative to torch's [out, in] nn.Linear weight layout).
    w1 = jax.random.uniform(k1, (input_size, hidden_size), jnp.float32, -bound1, bound1)
    b1 = jax.random.uniform(k2, (hidden_size,), jnp.float32, -bound1, bound1)
    w2 = jax.random.uniform(k3, (hidden_size, output_size), jnp.float32, -bound2, bound2)
    b2 = jax.random.uniform(k4, (output_size,), jnp.float32, -bound2, bound2)
    return w1, b1, w2, b2


if __name__ == "__main__":
    # Bag-of-words style input: batch of 10 sentences, vocab of 128 unique words, hidden=64,
    # 16 unique tags. B=10 exercises the batch-padding path and gives a 2-step grid
    # (megacore-shardable on v7x).
    B, INPUT, HIDDEN, OUTPUT = 10, 128, 64, 16

    key = jax.random.PRNGKey(0)
    kx, kp = jax.random.split(key)

    x = jax.random.uniform(kx, (B, INPUT), jnp.float32)   # bag-of-words counts in [0, 1)
    w1, b1, w2, b2 = init_params(kp, INPUT, HIDDEN, OUTPUT)

    params = prepare_params(w1, b1, w2, b2)               # one-time weight prep (hoisted)
    out = neural_net_forward(x, params)
    out = jax.block_until_ready(out)
    assert out.shape == (B, OUTPUT), out.shape

    # Reference mirroring the kernel's numerics (bf16 MXU inputs, f32 accumulation).
    ref_h = jnp.maximum(
        jnp.dot(x.astype(jnp.bfloat16), w1.astype(jnp.bfloat16),
                preferred_element_type=jnp.float32) + b1, 0.0)
    ref = jnp.dot(ref_h.astype(jnp.bfloat16), w2.astype(jnp.bfloat16),
                  preferred_element_type=jnp.float32) + b2
    assert jnp.allclose(out, ref, atol=5e-3, rtol=5e-3)

    # Sanity check against the pure-f32 math (looser tolerance due to bf16 MXU inputs).
    ref_f32 = jnp.maximum(x @ w1 + b1, 0.0) @ w2 + b2
    assert jnp.allclose(out, ref_f32, atol=5e-2, rtol=5e-2)

    print("KERNEL_OK")
</pallas_src>

<mosaic_0001>
module attributes {stable_mosaic.version = 11 : i64} {
  func.func @_mlp_kernel(%arg0: i32, %arg1: memref<8x128xf32, #tpu.memory_space<vmem>>, %arg2: memref<128x128xbf16, #tpu.memory_space<vmem>>, %arg3: memref<1x128xf32, #tpu.memory_space<vmem>>, %arg4: memref<128x16xbf16, #tpu.memory_space<vmem>>, %arg5: memref<1x16xf32, #tpu.memory_space<vmem>>, %arg6: memref<8x16xf32, #tpu.memory_space<vmem>>) attributes {dimension_semantics = [#tpu.dimension_semantics<parallel>], iteration_bounds = array<i64: 2>, scalar_prefetch = 0 : i64, scratch_operands = 0 : i64, tpu.core_type = #tpu.core_type<tc>, window_params = [{transform_indices = @transform_0, window_bounds = array<i64: 8, 128>}, {pipeline_mode = #tpu.pipeline_mode<synchronous>, transform_indices = @transform_1, window_bounds = array<i64: 128, 128>}, {pipeline_mode = #tpu.pipeline_mode<synchronous>, transform_indices = @transform_2, window_bounds = array<i64: 1, 128>}, {pipeline_mode = #tpu.pipeline_mode<synchronous>, transform_indices = @transform_3, window_bounds = array<i64: 128, 16>}, {pipeline_mode = #tpu.pipeline_mode<synchronous>, transform_indices = @transform_4, window_bounds = array<i64: 1, 16>}, {transform_indices = @transform_5, window_bounds = array<i64: 8, 16>}]} {
    %c0 = arith.constant 0 : index
    %c0_0 = arith.constant 0 : index
    %0 = vector.load %arg1[%c0, %c0_0] : memref<8x128xf32, #tpu.memory_space<vmem>>, vector<8x128xf32>
    %1 = arith.truncf %0 : vector<8x128xf32> to vector<8x128xbf16>
    %c0_1 = arith.constant 0 : index
    %c0_2 = arith.constant 0 : index
    %2 = vector.load %arg2[%c0_1, %c0_2] : memref<128x128xbf16, #tpu.memory_space<vmem>>, vector<128x128xbf16>
    %cst = arith.constant dense<0.000000e+00> : vector<8x128xf32>
    %3 = tpu.matmul %1, %2, %cst {dimension_numbers = #tpu.dot_dimension_numbers<[1], [0], [0], [1], [0, 0, 1, 1], [], []>} : vector<8x128xbf16>, vector<128x128xbf16>, vector<8x128xf32> -> vector<8x128xf32>
    %c0_3 = arith.constant 0 : index
    %c0_4 = arith.constant 0 : index
    %4 = vector.load %arg3[%c0_3, %c0_4] : memref<1x128xf32, #tpu.memory_space<vmem>>, vector<1x128xf32>
    %5 = vector.broadcast %4 : vector<1x128xf32> to vector<8x128xf32>
    %6 = arith.addf %3, %5 : vector<8x128xf32>
    %cst_5 = arith.constant 0.000000e+00 : f32
    %7 = vector.broadcast %cst_5 : f32 to vector<8x128xf32>
    %8 = arith.maximumf %6, %7 : vector<8x128xf32>
    %9 = arith.truncf %8 : vector<8x128xf32> to vector<8x128xbf16>
    %c0_6 = arith.constant 0 : index
    %c0_7 = arith.constant 0 : index
    %10 = vector.load %arg4[%c0_6, %c0_7] : memref<128x16xbf16, #tpu.memory_space<vmem>>, vector<128x16xbf16>
    %cst_8 = arith.constant dense<0.000000e+00> : vector<8x16xf32>
    %11 = tpu.matmul %9, %10, %cst_8 {dimension_numbers = #tpu.dot_dimension_numbers<[1], [0], [0], [1], [0, 0, 1, 1], [], []>} : vector<8x128xbf16>, vector<128x16xbf16>, vector<8x16xf32> -> vector<8x16xf32>
    %c0_9 = arith.constant 0 : index
    %c0_10 = arith.constant 0 : index
    %12 = vector.load %arg5[%c0_9, %c0_10] : memref<1x16xf32, #tpu.memory_space<vmem>>, vector<1x16xf32>
    %13 = vector.broadcast %12 : vector<1x16xf32> to vector<8x16xf32>
    %14 = arith.addf %11, %13 : vector<8x16xf32>
    %c0_11 = arith.constant 0 : index
    %c0_12 = arith.constant 0 : index
    %15 = vector.load %arg6[%c0_11, %c0_12] : memref<8x16xf32, #tpu.memory_space<vmem>>, vector<8x16xf32>
    tpu.vector_store %arg6[%c0_11, %c0_12], %14 {strides = array<i32>} : memref<8x16xf32, #tpu.memory_space<vmem>>, vector<8x16xf32>,
    return
  }
  func.func @transform_0(%arg0: i32) -> (i32, i32) {
    %c0_i32 = arith.constant 0 : i32
    %c0_i32_0 = arith.constant 0 : i32
    return %arg0, %c0_i32 : i32, i32
  }
  func.func @transform_1(%arg0: i32) -> (i32, i32) {
    %c0_i32 = arith.constant 0 : i32
    %c0_i32_0 = arith.constant 0 : i32
    %c0_i32_1 = arith.constant 0 : i32
    return %c0_i32, %c0_i32_0 : i32, i32
  }
  func.func @transform_2(%arg0: i32) -> (i32, i32) {
    %c0_i32 = arith.constant 0 : i32
    %c0_i32_0 = arith.constant 0 : i32
    %c0_i32_1 = arith.constant 0 : i32
    return %c0_i32, %c0_i32_0 : i32, i32
  }
  func.func @transform_3(%arg0: i32) -> (i32, i32) {
    %c0_i32 = arith.constant 0 : i32
    %c0_i32_0 = arith.constant 0 : i32
    %c0_i32_1 = arith.constant 0 : i32
    return %c0_i32, %c0_i32_0 : i32, i32
  }
  func.func @transform_4(%arg0: i32) -> (i32, i32) {
    %c0_i32 = arith.constant 0 : i32
    %c0_i32_0 = arith.constant 0 : i32
    %c0_i32_1 = arith.constant 0 : i32
    return %c0_i32, %c0_i32_0 : i32, i32
  }
  func.func @transform_5(%arg0: i32) -> (i32, i32) {
    %c0_i32 = arith.constant 0 : i32
    %c0_i32_0 = arith.constant 0 : i32
    return %arg0, %c0_i32 : i32, i32
  }
}

module attributes {stable_mosaic.version = 11 : i64} {
  func.func @_mlp_kernel(%arg0: i32, %arg1: memref<8x128xf32, #tpu.memory_space<vmem>>, %arg2: memref<128x128xbf16, #tpu.memory_space<vmem>>, %arg3: memref<1x128xf32, #tpu.memory_space<vmem>>, %arg4: memref<128x16xbf16, #tpu.memory_space<vmem>>, %arg5: memref<1x16xf32, #tpu.memory_space<vmem>>, %arg6: memref<8x16xf32, #tpu.memory_space<vmem>>) attributes {dimension_semantics = [#tpu.dimension_semantics<parallel>], iteration_bounds = array<i64: 2>, scalar_prefetch = 0 : i64, scratch_operands = 0 : i64, tpu.core_type = #tpu.core_type<tc>, window_params = [{transform_indices = @transform_0, window_bounds = array<i64: 8, 128>}, {pipeline_mode = #tpu.pipeline_mode<synchronous>, transform_indices = @transform_1, window_bounds = array<i64: 128, 128>}, {pipeline_mode = #tpu.pipeline_mode<synchronous>, transform_indices = @transform_2, window_bounds = array<i64: 1, 128>}, {pipeline_mode = #tpu.pipeline_mode<synchronous>, transform_indices = @transform_3, window_bounds = array<i64: 128, 16>}, {pipeline_mode = #tpu.pipeline_mode<synchronous>, transform_indices = @transform_4, window_bounds = array<i64: 1, 16>}, {transform_indices = @transform_5, window_bounds = array<i64: 8, 16>}]} {
    %c0 = arith.constant 0 : index
    %c0_0 = arith.constant 0 : index
    %0 = vector.load %arg1[%c0, %c0_0] : memref<8x128xf32, #tpu.memory_space<vmem>>, vector<8x128xf32>
    %1 = arith.truncf %0 : vector<8x128xf32> to vector<8x128xbf16>
    %c0_1 = arith.constant 0 : index
    %c0_2 = arith.constant 0 : index
    %2 = vector.load %arg2[%c0_1, %c0_2] : memref<128x128xbf16, #tpu.memory_space<vmem>>, vector<128x128xbf16>
    %cst = arith.constant dense<0.000000e+00> : vector<8x128xf32>
    %3 = tpu.matmul %1, %2, %cst {dimension_numbers = #tpu.dot_dimension_numbers<[1], [0], [0], [1], [0, 0, 1, 1], [], []>} : vector<8x128xbf16>, vector<128x128xbf16>, vector<8x128xf32> -> vector<8x128xf32>
    %c0_3 = arith.constant 0 : index
    %c0_4 = arith.constant 0 : index
    %4 = vector.load %arg3[%c0_3, %c0_4] : memref<1x128xf32, #tpu.memory_space<vmem>>, vector<1x128xf32>
    %5 = vector.broadcast %4 : vector<1x128xf32> to vector<8x128xf32>
    %6 = arith.addf %3, %5 : vector<8x128xf32>
    %cst_5 = arith.constant 0.000000e+00 : f32
    %7 = vector.broadcast %cst_5 : f32 to vector<8x128xf32>
    %8 = arith.maximumf %6, %7 : vector<8x128xf32>
    %9 = arith.truncf %8 : vector<8x128xf32> to vector<8x128xbf16>
    %c0_6 = arith.constant 0 : index
    %c0_7 = arith.constant 0 : index
    %10 = vector.load %arg4[%c0_6, %c0_7] : memref<128x16xbf16, #tpu.memory_space<vmem>>, vector<128x16xbf16>
    %cst_8 = arith.constant dense<0.000000e+00> : vector<8x16xf32>
    %11 = tpu.matmul %9, %10, %cst_8 {dimension_numbers = #tpu.dot_dimension_numbers<[1], [0], [0], [1], [0, 0, 1, 1], [], []>} : vector<8x128xbf16>, vector<128x16xbf16>, vector<8x16xf32> -> vector<8x16xf32>
    %c0_9 = arith.constant 0 : index
    %c0_10 = arith.constant 0 : index
    %12 = vector.load %arg5[%c0_9, %c0_10] : memref<1x16xf32, #tpu.memory_space<vmem>>, vector<1x16xf32>
    %13 = vector.broadcast %12 : vector<1x16xf32> to vector<8x16xf32>
    %14 = arith.addf %11, %13 : vector<8x16xf32>
    %c0_11 = arith.constant 0 : index
    %c0_12 = arith.constant 0 : index
    %15 = vector.load %arg6[%c0_11, %c0_12] : memref<8x16xf32, #tpu.memory_space<vmem>>, vector<8x16xf32>
    tpu.vector_store %arg6[%c0_11, %c0_12], %14 {strides = array<i32>} : memref<8x16xf32, #tpu.memory_space<vmem>>, vector<8x16xf32>,
    return
  }
  func.func @transform_0(%arg0: i32) -> (i32, i32) {
    %c0_i32 = arith.constant 0 : i32
    %c0_i32_0 = arith.constant 0 : i32
    return %arg0, %c0_i32 : i32, i32
  }
  func.func @transform_1(%arg0: i32) -> (i32, i32) {
    %c0_i32 = arith.constant 0 : i32
    %c0_i32_0 = arith.constant 0 : i32
    %c0_i32_1 = arith.constant 0 : i32
    return %c0_i32, %c0_i32_0 : i32, i32
  }
  func.func @transform_2(%arg0: i32) -> (i32, i32) {
    %c0_i32 = arith.constant 0 : i32
    %c0_i32_0 = arith.constant 0 : i32
    %c0_i32_1 = arith.constant 0 : i32
    return %c0_i32, %c0_i32_0 : i32, i32
  }
  func.func @transform_3(%arg0: i32) -> (i32, i32) {
    %c0_i32 = arith.constant 0 : i32
    %c0_i32_0 = arith.constant 0 : i32
    %c0_i32_1 = arith.constant 0 : i32
    return %c0_i32, %c0_i32_0 : i32, i32
  }
  func.func @transform_4(%arg0: i32) -> (i32, i32) {
    %c0_i32 = arith.constant 0 : i32
    %c0_i32_0 = arith.constant 0 : i32
    %c0_i32_1 = arith.constant 0 : i32
    return %c0_i32, %c0_i32_0 : i32, i32
  }
  func.func @transform_5(%arg0: i32) -> (i32, i32) {
    %c0_i32 = arith.constant 0 : i32
    %c0_i32_0 = arith.constant 0 : i32
    return %arg0, %c0_i32 : i32, i32
  }
}

</mosaic_0001>

<llo_original>
// kernel: tpu_custom_call.1
$region0: #{tpu_custom_call.1}
  #allocation0 [shape = 'u32[]', space=smem, size = 0x4, offset = 0x4, fixed_abs, tag = 'smem constant byte address 0x4 - core index']
  #allocation1 [shape = 'u32[144,128]{1,0:T(1,128)}', space=vmem, size = 0x12000, scoped, tag = 'internal scratch']
  %s0 = inlined_call_operand.hbm [shape: f32[16,128], index: 0, kind: input, shape index: {}]
  %s1 = inlined_call_operand.vmem [shape: bf16[128,128], index: 1, kind: input, shape index: {}]
  %s2 = inlined_call_operand.vmem [shape: f32[1,128], index: 2, kind: input, shape index: {}]
  %s3 = inlined_call_operand.vmem [shape: bf16[128,16], index: 3, kind: input, shape index: {}]
  %s4 = inlined_call_operand.vmem [shape: f32[1,16], index: 4, kind: input, shape index: {}]
  %s5 = inlined_call_operand.hbm [shape: f32[16,16], index: 5, kind: output, shape index: {}]
  %s6 = sld [smem:[#allocation0]]
  $region57: #{tpu_custom_call.1} parent=0
    _
  %s8 = ssub.s32 1, %s6
  %s9 = scalar_select 0, %s8, %s6
  $region1: #{tpu_custom_call.1} parent=0
    #allocation2 [shape = 'u8[8192]{0}', space=vmem, size = 0x2000, scoped, tag = 'input window, operand 0']
    #allocation3 [shape = 's32[2]{0}', space=sflag, size = 0x8, scoped, tag = 'scoped memory for tpu_custom_call.1']
    #allocation4 [shape = 's32[2]{0}', space=sflag, size = 0x8, scoped, tag = 'scoped memory for tpu_custom_call.1']
    #allocation5 [shape = 'u8[8192]{0}', space=vmem, size = 0x2000, scoped, tag = 'output window, operand 0']
    %10 = vsyncpa [#allocation3], 0
    %s11 = scalar_lea.sflag [#allocation3], 1
    %12 = vsyncpa %s11, 0
    %13 = vsyncpa [#allocation4], 0
    %s14 = scalar_lea.sflag [#allocation4], 1
    %15 = vsyncpa %s14, 0
    loop: start=0, step=1, limit=4
    $region2: #{tpu_custom_call.1} parent=1 // loop_pre_header
      _
    $region3: #{tpu_custom_call.1} parent=1 // loop_header
      %s17 = sphi 0, %s21
      %p18 = scmp.ge.s32.totalorder %s17, 4
      %s27 = sphi 0, %s29
      %s30 = sphi 0, %s27
      %s31 = sphi 0, %s30
      %s47 = sphi 0, %s31
      %s51 = sphi 0, %s51
      %s53 = sphi 0, %s51
      %s54 = sphi 0, %s53
      %s68 = sphi 0, %s54
      %s72 = sphi 0, %s72
      %s74 = sphi 0, %s72
      %s75 = sphi 0, %s74
      %s89 = sphi 0, %s75
      %s93 = sphi 0, %s93
      %s95 = sphi 0, %s93
      %s96 = sphi 0, %s95
      %s110 = sphi 0, %s96
      %s114 = sphi 0, %s114
      %s116 = sphi 0, %s114
      %s117 = sphi 0, %s116
      %s131 = sphi 0, %s117
      %s137 = sphi 0, %s139
      %s140 = sphi 0, %s137
      %s141 = sphi 0, %s140
      %s157 = sphi 0, %s141
    $region4: #{tpu_custom_call.1} parent=1 // loop_header_branch
      %20 = sbr.rel (%p18) target = $region8
    $region5: #{tpu_custom_call.1} parent=1 // loop_body
      %s22 = ssub.s32 %s17, 1
      %s23 = ssub.s32 %s17, 2
      %s24 = sadd.s32 %s17, 1
      %s25 = ssub.s32 %s17, %s24
      %p26 = scmp.eq.s32.totalorder %s25, 0
      %s28 = sadd.s32 %s27, 1
      %s29 = scalar_select %p26, %s27, %s28
      %p32 = pneg %p26
      %p33 = scmp.eq.s32.totalorder %s17, 1
      %p34 = por %p32, %p33
      %p35 = scmp.ne.s32.totalorder %s27, %s30
      %p36 = scmp.eq.s32.totalorder %s17, 0
      %p37 = por %p35, %p36
      %p38 = scmp.ne.s32.totalorder %s27, %s30
      %p39 = scmp.eq.s32.totalorder %s22, 1
      %p40 = por %p38, %p39
      %p41 = scmp.ne.s32.totalorder %s30, %s31
      %p42 = scmp.eq.s32.totalorder %s22, 0
      %p43 = por %p41, %p42
      %p44 = scmp.ne.s32.totalorder %s30, %s31
      %p45 = scmp.eq.s32.totalorder %s23, 1
      %p46 = por %p44, %p45
      %p48 = scmp.ne.s32.totalorder %s31, %s47
      %p49 = scmp.eq.s32.totalorder %s23, 0
      %p50 = por %p48, %p49
      %s52 = sadd.s32 %s51, 1
      %p55 = scmp.eq.s32.totalorder %s17, 1
      %p56 = scmp.ne.s32.totalorder %s51, %s53
      %p57 = scmp.eq.s32.totalorder %s17, 0
      %p58 = por %p56, %p57
      %p59 = scmp.ne.s32.totalorder %s51, %s53
      %p60 = scmp.eq.s32.totalorder %s22, 1
      %p61 = por %p59, %p60
      %p62 = scmp.ne.s32.totalorder %s53, %s54
      %p63 = scmp.eq.s32.totalorder %s22, 0
      %p64 = por %p62, %p63
      %p65 = scmp.ne.s32.totalorder %s53, %s54
      %p66 = scmp.eq.s32.totalorder %s23, 1
      %p67 = por %p65, %p66
      %p69 = scmp.ne.s32.totalorder %s54, %s68
      %p70 = scmp.eq.s32.totalorder %s23, 0
      %p71 = por %p69, %p70
      %s73 = sadd.s32 %s72, 1
      %p76 = scmp.eq.s32.totalorder %s17, 1
      %p77 = scmp.ne.s32.totalorder %s72, %s74
      %p78 = scmp.eq.s32.totalorder %s17, 0
      %p79 = por %p77, %p78
      %p80 = scmp.ne.s32.totalorder %s72, %s74
      %p81 = scmp.eq.s32.totalorder %s22, 1
      %p82 = por %p80, %p81
      %p83 = scmp.ne.s32.totalorder %s74, %s75
      %p84 = scmp.eq.s32.totalorder %s22, 0
      %p85 = por %p83, %p84
      %p86 = scmp.ne.s32.totalorder %s74, %s75
      %p87 = scmp.eq.s32.totalorder %s23, 1
      %p88 = por %p86, %p87
      %p90 = scmp.ne.s32.totalorder %s75, %s89
      %p91 = scmp.eq.s32.totalorder %s23, 0
      %p92 = por %p90, %p91
      %s94 = sadd.s32 %s93, 1
      %p97 = scmp.eq.s32.totalorder %s17, 1
      %p98 = scmp.ne.s32.totalorder %s93, %s95
      %p99 = scmp.eq.s32.totalorder %s17, 0
      %p100 = por %p98, %p99
      %p101 = scmp.ne.s32.totalorder %s93, %s95
      %p102 = scmp.eq.s32.totalorder %s22, 1
      %p103 = por %p101, %p102
      %p104 = scmp.ne.s32.totalorder %s95, %s96
      %p105 = scmp.eq.s32.totalorder %s22, 0
      %p106 = por %p104, %p105
      %p107 = scmp.ne.s32.totalorder %s95, %s96
      %p108 = scmp.eq.s32.totalorder %s23, 1
      %p109 = por %p107, %p108
      %p111 = scmp.ne.s32.totalorder %s96, %s110
      %p112 = scmp.eq.s32.totalorder %s23, 0
      %p113 = por %p111, %p112
      %s115 = sadd.s32 %s114, 1
      %p118 = scmp.eq.s32.totalorder %s17, 1
      %p119 = scmp.ne.s32.totalorder %s114, %s116
      %p120 = scmp.eq.s32.totalorder %s17, 0
      %p121 = por %p119, %p120
      %p122 = scmp.ne.s32.totalorder %s114, %s116
      %p123 = scmp.eq.s32.totalorder %s22, 1
      %p124 = por %p122, %p123
      %p125 = scmp.ne.s32.totalorder %s116, %s117
      %p126 = scmp.eq.s32.totalorder %s22, 0
      %p127 = por %p125, %p126
      %p128 = scmp.ne.s32.totalorder %s116, %s117
      %p129 = scmp.eq.s32.totalorder %s23, 1
      %p130 = por %p128, %p129
      %p132 = scmp.ne.s32.totalorder %s117, %s131
      %p133 = scmp.eq.s32.totalorder %s23, 0
      %p134 = por %p132, %p133
      %s135 = ssub.s32 %s17, %s24
      %p136 = scmp.eq.s32.totalorder %s135, 0
      %s138 = sadd.s32 %s137, 1
      %s139 = scalar_select %p136, %s137, %s138
      %p142 = pneg %p136
      %p143 = scmp.eq.s32.totalorder %s17, 1
      %p144 = por %p142, %p143
      %p145 = scmp.ne.s32.totalorder %s137, %s140
      %p146 = scmp.eq.s32.totalorder %s17, 0
      %p147 = por %p145, %p146
      %p148 = scmp.ne.s32.totalorder %s137, %s140
      %p149 = scmp.eq.s32.totalorder %s22, 1
      %p150 = por %p148, %p149
      %p151 = scmp.ne.s32.totalorder %s140, %s141
      %p152 = scmp.eq.s32.totalorder %s22, 0
      %p153 = por %p151, %p152
      %p154 = scmp.ne.s32.totalorder %s140, %s141
      %p155 = scmp.eq.s32.totalorder %s23, 1
      %p156 = por %p154, %p155
      %p158 = scmp.ne.s32.totalorder %s141, %s157
      %p159 = scmp.eq.s32.totalorder %s23, 0
      %p160 = por %p158, %p159
      %p161 = scmp.le.s32.totalorder 1, %s17
      %p162 = scmp.lt.s32.totalorder %s17, 3
      %p163 = pnand %p161, %p162
      %p164 = pneg %p163
      // Predicated region
      $region9: #{tpu_custom_call.1} parent=5 // pred_check
        _
      $region10: #{tpu_custom_call.1} parent=5 // pred_check_branch
        %166 = sbr.rel (%p163) target = $region12
      $region11: #{tpu_custom_call.1} parent=5 // pred_region
        %s167 = ssub.s32 %s17, 1
        // Predicated region
        $region13: #{tpu_custom_call.1} parent=11 // pred_check
          %p168 = pneg %p64
        $region14: #{tpu_custom_call.1} parent=11 // pred_check_branch
          %170 = sbr.rel (%p168) target = $region16
        $region15: #{tpu_custom_call.1} parent=11 // pred_region
          _
        $region16: #{tpu_custom_call.1} parent=11 // pred_fallthru
          _
        // Predicated region
        $region17: #{tpu_custom_call.1} parent=11 // pred_check
          %p171 = pneg %p85
        $region18: #{tpu_custom_call.1} parent=11 // pred_check_branch
          %173 = sbr.rel (%p171) target = $region20
        $region19: #{tpu_custom_call.1} parent=11 // pred_region
          _
        $region20: #{tpu_custom_call.1} parent=11 // pred_fallthru
          _
        // Predicated region
        $region21: #{tpu_custom_call.1} parent=11 // pred_check
          %p174 = pneg %p106
        $region22: #{tpu_custom_call.1} parent=11 // pred_check_branch
          %176 = sbr.rel (%p174) target = $region24
        $region23: #{tpu_custom_call.1} parent=11 // pred_region
          _
        $region24: #{tpu_custom_call.1} parent=11 // pred_fallthru
          _
        // Predicated region
        $region25: #{tpu_custom_call.1} parent=11 // pred_check
          %p177 = pneg %p127
        $region26: #{tpu_custom_call.1} parent=11 // pred_check_branch
          %179 = sbr.rel (%p177) target = $region28
        $region27: #{tpu_custom_call.1} parent=11 // pred_region
          _
        $region28: #{tpu_custom_call.1} parent=11 // pred_fallthru
          _
      $region12: #{tpu_custom_call.1} parent=5 // pred_fallthru
        _
      %p180 = scmp.lt.s32.totalorder %s17, 2
      // Predicated region
      $region29: #{tpu_custom_call.1} parent=5 // pred_check
        %p181 = pneg %p180
      $region30: #{tpu_custom_call.1} parent=5 // pred_check_branch
        %183 = sbr.rel (%p181) target = $region32
      $region31: #{tpu_custom_call.1} parent=5 // pred_region
        // Predicated region
        $region33: #{tpu_custom_call.1} parent=31 // pred_check
          %p184 = pneg %p37
        $region34: #{tpu_custom_call.1} parent=31 // pred_check_branch
          %186 = sbr.rel (%p184) target = $region36
        $region35: #{tpu_custom_call.1} parent=31 // pred_region
          %s187 = sand.u32 %s27, 1
          %s188 = scalar_lea.sflag [#allocation3], %s187
          %s189 = sand.u32 %s27, 1
          %s190 = smul.addr %s189, 8
          %s191 = scalar_lea.vmem [#allocation2], %s190
          %s193 = ssub.s32 128, 128
          %194 = vsyncadd %s188, %s193
          %s195 = smul.addr %s17, 128
          %s196 = scalar_lea.hbm %s0, %s195
          %s198 = sshll.u32 %s191, 4
          %s199 = int_to_ptr.vmem [resolvable:$true] %s198
          %201 = dma.hbm_to_vmem [thread:$0]  %s196, 128, %s199, %s188
        $region36: #{tpu_custom_call.1} parent=31 // pred_fallthru
          _
      $region32: #{tpu_custom_call.1} parent=5 // pred_fallthru
        _
      %p202 = scmp.le.s32.totalorder 1, %s17
      %p203 = scmp.lt.s32.totalorder %s17, 3
      %p204 = pnand %p202, %p203
      %p205 = pneg %p204
      // Predicated region
      $region37: #{tpu_custom_call.1} parent=5 // pred_check
        _
      $region38: #{tpu_custom_call.1} parent=5 // pred_check_branch
        %207 = sbr.rel (%p204) target = $region40
      $region39: #{tpu_custom_call.1} parent=5 // pred_region
        %s208 = ssub.s32 %s17, 1
        %s209 = sand.u32 %s30, 1
        %s210 = scalar_lea.sflag [#allocation3], %s209
        %s211 = sand.u32 %s30, 1
        %s212 = smul.addr %s211, 8
        %s213 = scalar_lea.vmem [#allocation2], %s212
        // Predicated region
        $region41: #{tpu_custom_call.1} parent=39 // pred_check
          %p214 = pneg %p43
        $region42: #{tpu_custom_call.1} parent=39 // pred_check_branch
          %216 = sbr.rel (%p214) target = $region44
        $region43: #{tpu_custom_call.1} parent=39 // pred_region
          %217 = dma.done %s210, 128
        $region44: #{tpu_custom_call.1} parent=39 // pred_fallthru
          _
        %s218 = sand.u32 %s30, 1
        %s219 = scalar_lea.sflag [#allocation3], %s218
        %s220 = sand.u32 %s30, 1
        %s221 = smul.addr %s220, 8
        %s222 = scalar_lea.vmem [#allocation2], %s221
        %p223 = pneg %p43
        %p224 = pneg %p40
        %p225 = pneg %p64
        %p226 = pneg %p61
        %p227 = pneg %p85
        %p228 = pneg %p82
        %p229 = pneg %p106
        %p230 = pneg %p103
        %p231 = pneg %p127
        %p232 = pneg %p124
        %p233 = pneg %p153
        %p234 = pneg %p150
        %s235 = sand.u32 %s140, 1
        %s236 = scalar_lea.sflag [#allocation4], %s235
        %s237 = sand.u32 %s140, 1
        %s238 = smul.addr %s237, 8
        %s239 = scalar_lea.vmem [#allocation5], %s238
        %v241 = vld [vmem:[%s213] sm:$0xff]
        %v242 = vpack.c.bf16 %v241, %v241
        %v243 = vld [vmem:[%s1] sm:$0xf]
        %v244 = vld [vmem:[%s1 + $0x4] sm:$0xf]
        %v245 = vld [vmem:[%s1 + $0x8] sm:$0xf]
        %v246 = vld [vmem:[%s1 + $0xc] sm:$0xf]
        %v247 = vld [vmem:[%s1 + $0x10] sm:$0xf]
        %v248 = vld [vmem:[%s1 + $0x14] sm:$0xf]
        %v249 = vld [vmem:[%s1 + $0x18] sm:$0xf]
        %v250 = vld [vmem:[%s1 + $0x1c] sm:$0xf]
        %v251 = vld [vmem:[%s1 + $0x20] sm:$0xf]
        %v252 = vld [vmem:[%s1 + $0x24] sm:$0xf]
        %v253 = vld [vmem:[%s1 + $0x28] sm:$0xf]
        %v254 = vld [vmem:[%s1 + $0x2c] sm:$0xf]
        %v255 = vld [vmem:[%s1 + $0x30] sm:$0xf]
        %v256 = vld [vmem:[%s1 + $0x34] sm:$0xf]
        %v257 = vld [vmem:[%s1 + $0x38] sm:$0xf]
        %v258 = vld [vmem:[%s1 + $0x3c] sm:$0xf]
        %v259 = vld [vmem:[%s2] sm:$0x1]
        %v261 = vlaneseq
        %v262 = vshrl.u32 %v261, 7
        %v263 = vsub.s32 0, %v262
        %v264 = vrot.slane %v259, %v263
        %v282 = vunpack.c.l.b16 %v243
        %v283 = vunpack.c.l.b16 %v244
        %v284 = vunpack.c.l.b16 %v245
        %v285 = vunpack.c.l.b16 %v246
        %v286 = vunpack.c.l.b16 %v247
        %v287 = vunpack.c.l.b16 %v248
        %v288 = vunpack.c.l.b16 %v249
        %v289 = vunpack.c.l.b16 %v250
        %v290 = vunpack.c.l.b16 %v251
        %v291 = vunpack.c.l.b16 %v252
        %v292 = vunpack.c.l.b16 %v253
        %v293 = vunpack.c.l.b16 %v254
        %v294 = vunpack.c.l.b16 %v255
        %v295 = vunpack.c.l.b16 %v256
        %v296 = vunpack.c.l.b16 %v257
        %v297 = vunpack.c.l.b16 %v258
        %v298 = vpack.c.b16 %v283, %v282
        %v299 = vpack.c.b16 %v285, %v284
        %v300 = vpack.c.b16 %v287, %v286
        %v301 = vpack.c.b16 %v289, %v288
        %v302 = vpack.c.b16 %v291, %v290
        %v303 = vpack.c.b16 %v293, %v292
        %v304 = vpack.c.b16 %v295, %v294
        %v305 = vpack.c.b16 %v297, %v296
        %314 = vmatprep.subr.bf16.mxu0 0
        %315 = vmatpush1.bf16.msra.mxu0 %v298
        %316 = vmatprep.subr.bf16.mxu0 0
        %317 = vmatpush1.bf16.msra.mxu0 %v299
        %318 = vmatprep.subr.bf16.mxu0 0
        %319 = vmatpush1.bf16.msra.mxu0 %v300
        %320 = vmatprep.subr.bf16.mxu0 0
        %321 = vmatpush1.bf16.msra.mxu0 %v301
        %322 = vmatprep.subr.bf16.mxu0 0
        %323 = vmatpush1.bf16.msra.mxu0 %v302
        %324 = vmatprep.subr.bf16.mxu0 0
        %325 = vmatpush1.bf16.msra.mxu0 %v303
        %326 = vmatprep.subr.bf16.mxu0 0
        %327 = vmatpush1.bf16.msra.mxu0 %v304
        %328 = vmatprep.subr.bf16.mxu0 0
        %329 = vmatpush1.bf16.msra.mxu0 %v305
        %330 = vmatprep.subr.bf16.mxu0 0
        %331 = vmatpush1.bf16.msra.mxu0 0
        %332 = vmatprep.subr.bf16.mxu0 0
        %333 = vmatpush1.bf16.msra.mxu0 0
        %334 = vmatprep.subr.bf16.mxu0 0
        %335 = vmatpush1.bf16.msra.mxu0 0
        %336 = vmatprep.subr.bf16.mxu0 0
        %337 = vmatpush1.bf16.msra.mxu0 0
        %338 = vmatprep.subr.bf16.mxu0 0
        %339 = vmatpush1.bf16.msra.mxu0 0
        %340 = vmatprep.subr.bf16.mxu0 0
        %341 = vmatpush1.bf16.msra.mxu0 0
        %342 = vmatprep.subr.bf16.mxu0 0
        %343 = vmatpush1.bf16.msra.mxu0 0
        %344 = vmatprep.subr.bf16.mxu0 0
        %345 = vmatpush1.bf16.msra.mxu0 0
        %346 = vmatprep.mubr.bf16.mxu0 0
        %347 = vmatmul.mubr.bf16.gmra.mrb[0].mxu0 %v242
        %v348 = vpop.f32.mrb[0].mxu0
        %v349 = vadd.f32 %v264, %v348
        %v350 = vpop.f32.mrb[0].mxu0
        %v351 = vpop.f32.mrb[0].mxu0
        %v352 = vpop.f32.mrb[0].mxu0
        %353 = vdwg.mxu0
        %v354 = vmax.f32 %v349, 0.0
        %v355 = vpack.c.bf16 %v354, %v354
        %v356 = vld [vmem:[%s3] sm:$0xf]
        %v357 = vld [vmem:[%s3 + $0x4] sm:$0xf]
        %v358 = vld [vmem:[%s3 + $0x8] sm:$0xf]
        %v359 = vld [vmem:[%s3 + $0xc] sm:$0xf]
        %v360 = vld [vmem:[%s3 + $0x10] sm:$0xf]
        %v361 = vld [vmem:[%s3 + $0x14] sm:$0xf]
        %v362 = vld [vmem:[%s3 + $0x18] sm:$0xf]
        %v363 = vld [vmem:[%s3 + $0x1c] sm:$0xf]
        %v364 = vld [vmem:[%s3 + $0x20] sm:$0xf]
        %v365 = vld [vmem:[%s3 + $0x24] sm:$0xf]
        %v366 = vld [vmem:[%s3 + $0x28] sm:$0xf]
        %v367 = vld [vmem:[%s3 + $0x2c] sm:$0xf]
        %v368 = vld [vmem:[%s3 + $0x30] sm:$0xf]
        %v369 = vld [vmem:[%s3 + $0x34] sm:$0xf]
        %v370 = vld [vmem:[%s3 + $0x38] sm:$0xf]
        %v371 = vld [vmem:[%s3 + $0x3c] sm:$0xf]
        %v372 = vld [vmem:[%s4] sm:$0x1]
        %v374 = vlaneseq
        %v375 = vshrl.u32 %v374, 7
        %v376 = vsub.s32 0, %v375
        %v377 = vrot.slane %v372, %v376
        %v395 = vunpack.c.l.b16 %v356
        %v396 = vunpack.c.l.b16 %v357
        %v397 = vunpack.c.l.b16 %v358
        %v398 = vunpack.c.l.b16 %v359
        %v399 = vunpack.c.l.b16 %v360
        %v400 = vunpack.c.l.b16 %v361
        %v401 = vunpack.c.l.b16 %v362
        %v402 = vunpack.c.l.b16 %v363
        %v403 = vunpack.c.l.b16 %v364
        %v404 = vunpack.c.l.b16 %v365
        %v405 = vunpack.c.l.b16 %v366
        %v406 = vunpack.c.l.b16 %v367
        %v407 = vunpack.c.l.b16 %v368
        %v408 = vunpack.c.l.b16 %v369
        %v409 = vunpack.c.l.b16 %v370
        %v410 = vunpack.c.l.b16 %v371
        %v411 = vpack.c.b16 %v396, %v395
        %v412 = vpack.c.b16 %v398, %v397
        %v413 = vpack.c.b16 %v400, %v399
        %v414 = vpack.c.b16 %v402, %v401
        %v415 = vpack.c.b16 %v404, %v403
        %v416 = vpack.c.b16 %v406, %v405
        %v417 = vpack.c.b16 %v408, %v407
        %v418 = vpack.c.b16 %v410, %v409
        %427 = vmatprep.subr.bf16.mxu0 0
        %428 = vmatpush1.bf16.msra.mxu0 %v411
        %429 = vmatprep.subr.bf16.mxu0 0
        %430 = vmatpush1.bf16.msra.mxu0 %v412
        %431 = vmatprep.subr.bf16.mxu0 0
        %432 = vmatpush1.bf16.msra.mxu0 %v413
        %433 = vmatprep.subr.bf16.mxu0 0
        %434 = vmatpush1.bf16.msra.mxu0 %v414
        %435 = vmatprep.subr.bf16.mxu0 0
        %436 = vmatpush1.bf16.msra.mxu0 %v415
        %437 = vmatprep.subr.bf16.mxu0 0
        %438 = vmatpush1.bf16.msra.mxu0 %v416
        %439 = vmatprep.subr.bf16.mxu0 0
        %440 = vmatpush1.bf16.msra.mxu0 %v417
        %441 = vmatprep.subr.bf16.mxu0 0
        %442 = vmatpush1.bf16.msra.mxu0 %v418
        %443 = vmatprep.subr.bf16.mxu0 0
        %444 = vmatpush1.bf16.msra.mxu0 0
        %445 = vmatprep.subr.bf16.mxu0 0
        %446 = vmatpush1.bf16.msra.mxu0 0
        %447 = vmatprep.subr.bf16.mxu0 0
        %448 = vmatpush1.bf16.msra.mxu0 0
        %449 = vmatprep.subr.bf16.mxu0 0
        %450 = vmatpush1.bf16.msra.mxu0 0
        %451 = vmatprep.subr.bf16.mxu0 0
        %452 = vmatpush1.bf16.msra.mxu0 0
        %453 = vmatprep.subr.bf16.mxu0 0
        %454 = vmatpush1.bf16.msra.mxu0 0
        %455 = vmatprep.subr.bf16.mxu0 0
        %456 = vmatpush1.bf16.msra.mxu0 0
        %457 = vmatprep.subr.bf16.mxu0 0
        %458 = vmatpush1.bf16.msra.mxu0 0
        %459 = vmatprep.mubr.bf16.mxu0 0
        %460 = vmatmul.mubr.bf16.gmra.mrb[0].mxu0 %v355
        %v461 = vpop.f32.mrb[0].mxu0
        %v462 = vadd.f32 %v377, %v461
        %v463 = vpop.f32.mrb[0].mxu0
        %v464 = vpop.f32.mrb[0].mxu0
        %v465 = vpop.f32.mrb[0].mxu0
        %466 = vdwg.mxu0
        %vm467 = vcmask 130048
        %468 = vst.msk [vmem:[%s239] sm:$0xff] %vm467, %v462
        %s469 = sand.u32 %s140, 1
        %s470 = scalar_lea.sflag [#allocation4], %s469
        %s471 = sand.u32 %s140, 1
        %s472 = smul.addr %s471, 8
        %s473 = scalar_lea.vmem [#allocation5], %s472
        // Predicated region
        $region45: #{tpu_custom_call.1} parent=39 // pred_check
          %p474 = pneg %p150
        $region46: #{tpu_custom_call.1} parent=39 // pred_check_branch
          %476 = sbr.rel (%p474) target = $region48
        $region47: #{tpu_custom_call.1} parent=39 // pred_region
          %s478 = ssub.s32 128, 128
          %479 = vsyncadd %s470, %s478
          %s480 = smul.addr %s22, 128
          %s481 = scalar_lea.hbm %s5, %s480
          %s483 = sshll.u32 %s473, 4
          %s484 = int_to_ptr.vmem [resolvable:$true] %s483
          %486 = dma.vmem_to_hbm [thread:$0]  %s484, 128, %s481, %s470
        $region48: #{tpu_custom_call.1} parent=39 // pred_fallthru
          _
      $region40: #{tpu_custom_call.1} parent=5 // pred_fallthru
        _
      %p487 = scmp.le.s32.totalorder 2, %s17
      // Predicated region
      $region49: #{tpu_custom_call.1} parent=5 // pred_check
        %p488 = pneg %p487
      $region50: #{tpu_custom_call.1} parent=5 // pred_check_branch
        %490 = sbr.rel (%p488) target = $region52
      $region51: #{tpu_custom_call.1} parent=5 // pred_region
        %s491 = ssub.s32 %s17, 2
        // Predicated region
        $region53: #{tpu_custom_call.1} parent=51 // pred_check
          %p492 = pneg %p156
        $region54: #{tpu_custom_call.1} parent=51 // pred_check_branch
          %494 = sbr.rel (%p492) target = $region56
        $region55: #{tpu_custom_call.1} parent=51 // pred_region
          %s495 = sand.u32 %s141, 1
          %s496 = scalar_lea.sflag [#allocation4], %s495
          %s497 = sand.u32 %s141, 1
          %s498 = smul.addr %s497, 8
          %s499 = scalar_lea.vmem [#allocation5], %s498
          %500 = dma.done %s496, 128
        $region56: #{tpu_custom_call.1} parent=51 // pred_fallthru
          _
      $region52: #{tpu_custom_call.1} parent=5 // pred_fallthru
        _
    $region6: #{tpu_custom_call.1} parent=1 // loop_footer
      %s21 = sadd.s32 1, %s17
    $region7: #{tpu_custom_call.1} parent=1 // loop_footer_branch
      %16 = sbr.rel target = $region3
    $region8: #{tpu_custom_call.1} parent=1 // loop_exit
      _
    %501 = vsyncpa [#allocation3], 1
    %s502 = scalar_lea.sflag [#allocation3], 1
    %503 = vsyncpa %s502, 1
    %504 = vsyncpa [#allocation4], 1
    %s505 = scalar_lea.sflag [#allocation4], 1
    %506 = vsyncpa %s505, 1

// kernel: tpu_custom_call.1
$region0: #{tpu_custom_call.1}
  #allocation0 [shape = 'u32[]', space=smem, size = 0x4, offset = 0x4, fixed_abs, tag = 'smem constant byte address 0x4 - core index']
  #allocation1 [shape = 'u32[144,128]{1,0:T(1,128)}', space=vmem, size = 0x12000, scoped, tag = 'internal scratch']
  %s0 = inlined_call_operand.hbm [shape: f32[16,128], index: 0, kind: input, shape index: {}]
  %s1 = inlined_call_operand.vmem [shape: bf16[128,128], index: 1, kind: input, shape index: {}]
  %s2 = inlined_call_operand.vmem [shape: f32[1,128], index: 2, kind: input, shape index: {}]
  %s3 = inlined_call_operand.vmem [shape: bf16[128,16], index: 3, kind: input, shape index: {}]
  %s4 = inlined_call_operand.vmem [shape: f32[1,16], index: 4, kind: input, shape index: {}]
  %s5 = inlined_call_operand.hbm [shape: f32[16,16], index: 5, kind: output, shape index: {}]
  %s6 = sld [smem:[#allocation0]]
  $region57: #{tpu_custom_call.1} parent=0
    _
  %s8 = ssub.s32 1, %s6
  %s9 = scalar_select 0, %s8, %s6
  $region1: #{tpu_custom_call.1} parent=0
    #allocation2 [shape = 'u8[8192]{0}', space=vmem, size = 0x2000, scoped, tag = 'input window, operand 0']
    #allocation3 [shape = 's32[2]{0}', space=sflag, size = 0x8, scoped, tag = 'scoped memory for tpu_custom_call.1']
    #allocation4 [shape = 's32[2]{0}', space=sflag, size = 0x8, scoped, tag = 'scoped memory for tpu_custom_call.1']
    #allocation5 [shape = 'u8[8192]{0}', space=vmem, size = 0x2000, scoped, tag = 'output window, operand 0']
    %10 = vsyncpa [#allocation3], 0
    %s11 = scalar_lea.sflag [#allocation3], 1
    %12 = vsyncpa %s11, 0
    %13 = vsyncpa [#allocation4], 0
    %s14 = scalar_lea.sflag [#allocation4], 1
    %15 = vsyncpa %s14, 0
    loop: start=0, step=1, limit=4
    $region2: #{tpu_custom_call.1} parent=1 // loop_pre_header
      _
    $region3: #{tpu_custom_call.1} parent=1 // loop_header
      %s17 = sphi 0, %s21
      %p18 = scmp.ge.s32.totalorder %s17, 4
      %s27 = sphi 0, %s29
      %s30 = sphi 0, %s27
      %s31 = sphi 0, %s30
      %s47 = sphi 0, %s31
      %s51 = sphi 0, %s51
      %s53 = sphi 0, %s51
      %s54 = sphi 0, %s53
      %s68 = sphi 0, %s54
      %s72 = sphi 0, %s72
      %s74 = sphi 0, %s72
      %s75 = sphi 0, %s74
      %s89 = sphi 0, %s75
      %s93 = sphi 0, %s93
      %s95 = sphi 0, %s93
      %s96 = sphi 0, %s95
      %s110 = sphi 0, %s96
      %s114 = sphi 0, %s114
      %s116 = sphi 0, %s114
      %s117 = sphi 0, %s116
      %s131 = sphi 0, %s117
      %s137 = sphi 0, %s139
      %s140 = sphi 0, %s137
      %s141 = sphi 0, %s140
      %s157 = sphi 0, %s141
    $region4: #{tpu_custom_call.1} parent=1 // loop_header_branch
      %20 = sbr.rel (%p18) target = $region8
    $region5: #{tpu_custom_call.1} parent=1 // loop_body
      %s22 = ssub.s32 %s17, 1
      %s23 = ssub.s32 %s17, 2
      %s24 = sadd.s32 %s17, 1
      %s25 = ssub.s32 %s17, %s24
      %p26 = scmp.eq.s32.totalorder %s25, 0
      %s28 = sadd.s32 %s27, 1
      %s29 = scalar_select %p26, %s27, %s28
      %p32 = pneg %p26
      %p33 = scmp.eq.s32.totalorder %s17, 1
      %p34 = por %p32, %p33
      %p35 = scmp.ne.s32.totalorder %s27, %s30
      %p36 = scmp.eq.s32.totalorder %s17, 0
      %p37 = por %p35, %p36
      %p38 = scmp.ne.s32.totalorder %s27, %s30
      %p39 = scmp.eq.s32.totalorder %s22, 1
      %p40 = por %p38, %p39
      %p41 = scmp.ne.s32.totalorder %s30, %s31
      %p42 = scmp.eq.s32.totalorder %s22, 0
      %p43 = por %p41, %p42
      %p44 = scmp.ne.s32.totalorder %s30, %s31
      %p45 = scmp.eq.s32.totalorder %s23, 1
      %p46 = por %p44, %p45
      %p48 = scmp.ne.s32.totalorder %s31, %s47
      %p49 = scmp.eq.s32.totalorder %s23, 0
      %p50 = por %p48, %p49
      %s52 = sadd.s32 %s51, 1
      %p55 = scmp.eq.s32.totalorder %s17, 1
      %p56 = scmp.ne.s32.totalorder %s51, %s53
      %p57 = scmp.eq.s32.totalorder %s17, 0
      %p58 = por %p56, %p57
      %p59 = scmp.ne.s32.totalorder %s51, %s53
      %p60 = scmp.eq.s32.totalorder %s22, 1
      %p61 = por %p59, %p60
      %p62 = scmp.ne.s32.totalorder %s53, %s54
      %p63 = scmp.eq.s32.totalorder %s22, 0
      %p64 = por %p62, %p63
      %p65 = scmp.ne.s32.totalorder %s53, %s54
      %p66 = scmp.eq.s32.totalorder %s23, 1
      %p67 = por %p65, %p66
      %p69 = scmp.ne.s32.totalorder %s54, %s68
      %p70 = scmp.eq.s32.totalorder %s23, 0
      %p71 = por %p69, %p70
      %s73 = sadd.s32 %s72, 1
      %p76 = scmp.eq.s32.totalorder %s17, 1
      %p77 = scmp.ne.s32.totalorder %s72, %s74
      %p78 = scmp.eq.s32.totalorder %s17, 0
      %p79 = por %p77, %p78
      %p80 = scmp.ne.s32.totalorder %s72, %s74
      %p81 = scmp.eq.s32.totalorder %s22, 1
      %p82 = por %p80, %p81
      %p83 = scmp.ne.s32.totalorder %s74, %s75
      %p84 = scmp.eq.s32.totalorder %s22, 0
      %p85 = por %p83, %p84
      %p86 = scmp.ne.s32.totalorder %s74, %s75
      %p87 = scmp.eq.s32.totalorder %s23, 1
      %p88 = por %p86, %p87
      %p90 = scmp.ne.s32.totalorder %s75, %s89
      %p91 = scmp.eq.s32.totalorder %s23, 0
      %p92 = por %p90, %p91
      %s94 = sadd.s32 %s93, 1
      %p97 = scmp.eq.s32.totalorder %s17, 1
      %p98 = scmp.ne.s32.totalorder %s93, %s95
      %p99 = scmp.eq.s32.totalorder %s17, 0
      %p100 = por %p98, %p99
      %p101 = scmp.ne.s32.totalorder %s93, %s95
      %p102 = scmp.eq.s32.totalorder %s22, 1
      %p103 = por %p101, %p102
      %p104 = scmp.ne.s32.totalorder %s95, %s96
      %p105 = scmp.eq.s32.totalorder %s22, 0
      %p106 = por %p104, %p105
      %p107 = scmp.ne.s32.totalorder %s95, %s96
      %p108 = scmp.eq.s32.totalorder %s23, 1
      %p109 = por %p107, %p108
      %p111 = scmp.ne.s32.totalorder %s96, %s110
      %p112 = scmp.eq.s32.totalorder %s23, 0
      %p113 = por %p111, %p112
      %s115 = sadd.s32 %s114, 1
      %p118 = scmp.eq.s32.totalorder %s17, 1
      %p119 = scmp.ne.s32.totalorder %s114, %s116
      %p120 = scmp.eq.s32.totalorder %s17, 0
      %p121 = por %p119, %p120
      %p122 = scmp.ne.s32.totalorder %s114, %s116
      %p123 = scmp.eq.s32.totalorder %s22, 1
      %p124 = por %p122, %p123
      %p125 = scmp.ne.s32.totalorder %s116, %s117
      %p126 = scmp.eq.s32.totalorder %s22, 0
      %p127 = por %p125, %p126
      %p128 = scmp.ne.s32.totalorder %s116, %s117
      %p129 = scmp.eq.s32.totalorder %s23, 1
      %p130 = por %p128, %p129
      %p132 = scmp.ne.s32.totalorder %s117, %s131
      %p133 = scmp.eq.s32.totalorder %s23, 0
      %p134 = por %p132, %p133
      %s135 = ssub.s32 %s17, %s24
      %p136 = scmp.eq.s32.totalorder %s135, 0
      %s138 = sadd.s32 %s137, 1
      %s139 = scalar_select %p136, %s137, %s138
      %p142 = pneg %p136
      %p143 = scmp.eq.s32.totalorder %s17, 1
      %p144 = por %p142, %p143
      %p145 = scmp.ne.s32.totalorder %s137, %s140
      %p146 = scmp.eq.s32.totalorder %s17, 0
      %p147 = por %p145, %p146
      %p148 = scmp.ne.s32.totalorder %s137, %s140
      %p149 = scmp.eq.s32.totalorder %s22, 1
      %p150 = por %p148, %p149
      %p151 = scmp.ne.s32.totalorder %s140, %s141
      %p152 = scmp.eq.s32.totalorder %s22, 0
      %p153 = por %p151, %p152
      %p154 = scmp.ne.s32.totalorder %s140, %s141
      %p155 = scmp.eq.s32.totalorder %s23, 1
      %p156 = por %p154, %p155
      %p158 = scmp.ne.s32.totalorder %s141, %s157
      %p159 = scmp.eq.s32.totalorder %s23, 0
      %p160 = por %p158, %p159
      %p161 = scmp.le.s32.totalorder 1, %s17
      %p162 = scmp.lt.s32.totalorder %s17, 3
      %p163 = pnand %p161, %p162
      %p164 = pneg %p163
      // Predicated region
      $region9: #{tpu_custom_call.1} parent=5 // pred_check
        _
      $region10: #{tpu_custom_call.1} parent=5 // pred_check_branch
        %166 = sbr.rel (%p163) target = $region12
      $region11: #{tpu_custom_call.1} parent=5 // pred_region
        %s167 = ssub.s32 %s17, 1
        // Predicated region
        $region13: #{tpu_custom_call.1} parent=11 // pred_check
          %p168 = pneg %p64
        $region14: #{tpu_custom_call.1} parent=11 // pred_check_branch
          %170 = sbr.rel (%p168) target = $region16
        $region15: #{tpu_custom_call.1} parent=11 // pred_region
          _
        $region16: #{tpu_custom_call.1} parent=11 // pred_fallthru
          _
        // Predicated region
        $region17: #{tpu_custom_call.1} parent=11 // pred_check
          %p171 = pneg %p85
        $region18: #{tpu_custom_call.1} parent=11 // pred_check_branch
          %173 = sbr.rel (%p171) target = $region20
        $region19: #{tpu_custom_call.1} parent=11 // pred_region
          _
        $region20: #{tpu_custom_call.1} parent=11 // pred_fallthru
          _
        // Predicated region
        $region21: #{tpu_custom_call.1} parent=11 // pred_check
          %p174 = pneg %p106
        $region22: #{tpu_custom_call.1} parent=11 // pred_check_branch
          %176 = sbr.rel (%p174) target = $region24
        $region23: #{tpu_custom_call.1} parent=11 // pred_region
          _
        $region24: #{tpu_custom_call.1} parent=11 // pred_fallthru
          _
        // Predicated region
        $region25: #{tpu_custom_call.1} parent=11 // pred_check
          %p177 = pneg %p127
        $region26: #{tpu_custom_call.1} parent=11 // pred_check_branch
          %179 = sbr.rel (%p177) target = $region28
        $region27: #{tpu_custom_call.1} parent=11 // pred_region
          _
        $region28: #{tpu_custom_call.1} parent=11 // pred_fallthru
          _
      $region12: #{tpu_custom_call.1} parent=5 // pred_fallthru
        _
      %p180 = scmp.lt.s32.totalorder %s17, 2
      // Predicated region
      $region29: #{tpu_custom_call.1} parent=5 // pred_check
        %p181 = pneg %p180
      $region30: #{tpu_custom_call.1} parent=5 // pred_check_branch
        %183 = sbr.rel (%p181) target = $region32
      $region31: #{tpu_custom_call.1} parent=5 // pred_region
        // Predicated region
        $region33: #{tpu_custom_call.1} parent=31 // pred_check
          %p184 = pneg %p37
        $region34: #{tpu_custom_call.1} parent=31 // pred_check_branch
          %186 = sbr.rel (%p184) target = $region36
        $region35: #{tpu_custom_call.1} parent=31 // pred_region
          %s187 = sand.u32 %s27, 1
          %s188 = scalar_lea.sflag [#allocation3], %s187
          %s189 = sand.u32 %s27, 1
          %s190 = smul.addr %s189, 8
          %s191 = scalar_lea.vmem [#allocation2], %s190
          %s193 = ssub.s32 128, 128
          %194 = vsyncadd %s188, %s193
          %s195 = smul.addr %s17, 128
          %s196 = scalar_lea.hbm %s0, %s195
          %s198 = sshll.u32 %s191, 4
          %s199 = int_to_ptr.vmem [resolvable:$true] %s198
          %201 = dma.hbm_to_vmem [thread:$0]  %s196, 128, %s199, %s188
        $region36: #{tpu_custom_call.1} parent=31 // pred_fallthru
          _
      $region32: #{tpu_custom_call.1} parent=5 // pred_fallthru
        _
      %p202 = scmp.le.s32.totalorder 1, %s17
      %p203 = scmp.lt.s32.totalorder %s17, 3
      %p204 = pnand %p202, %p203
      %p205 = pneg %p204
      // Predicated region
      $region37: #{tpu_custom_call.1} parent=5 // pred_check
        _
      $region38: #{tpu_custom_call.1} parent=5 // pred_check_branch
        %207 = sbr.rel (%p204) target = $region40
      $region39: #{tpu_custom_call.1} parent=5 // pred_region
        %s208 = ssub.s32 %s17, 1
        %s209 = sand.u32 %s30, 1
        %s210 = scalar_lea.sflag [#allocation3], %s209
        %s211 = sand.u32 %s30, 1
        %s212 = smul.addr %s211, 8
        %s213 = scalar_lea.vmem [#allocation2], %s212
        // Predicated region
        $region41: #{tpu_custom_call.1} parent=39 // pred_check
          %p214 = pneg %p43
        $region42: #{tpu_custom_call.1} parent=39 // pred_check_branch
          %216 = sbr.rel (%p214) target = $region44
        $region43: #{tpu_custom_call.1} parent=39 // pred_region
          %217 = dma.done %s210, 128
        $region44: #{tpu_custom_call.1} parent=39 // pred_fallthru
          _
        %s218 = sand.u32 %s30, 1
        %s219 = scalar_lea.sflag [#allocation3], %s218
        %s220 = sand.u32 %s30, 1
        %s221 = smul.addr %s220, 8
        %s222 = scalar_lea.vmem [#allocation2], %s221
        %p223 = pneg %p43
        %p224 = pneg %p40
        %p225 = pneg %p64
        %p226 = pneg %p61
        %p227 = pneg %p85
        %p228 = pneg %p82
        %p229 = pneg %p106
        %p230 = pneg %p103
        %p231 = pneg %p127
        %p232 = pneg %p124
        %p233 = pneg %p153
        %p234 = pneg %p150
        %s235 = sand.u32 %s140, 1
        %s236 = scalar_lea.sflag [#allocation4], %s235
        %s237 = sand.u32 %s140, 1
        %s238 = smul.addr %s237, 8
        %s239 = scalar_lea.vmem [#allocation5], %s238
        %v241 = vld [vmem:[%s213] sm:$0xff]
        %v242 = vpack.c.bf16 %v241, %v241
        %v243 = vld [vmem:[%s1] sm:$0xf]
        %v244 = vld [vmem:[%s1 + $0x4] sm:$0xf]
        %v245 = vld [vmem:[%s1 + $0x8] sm:$0xf]
        %v246 = vld [vmem:[%s1 + $0xc] sm:$0xf]
        %v247 = vld [vmem:[%s1 + $0x10] sm:$0xf]
        %v248 = vld [vmem:[%s1 + $0x14] sm:$0xf]
        %v249 = vld [vmem:[%s1 + $0x18] sm:$0xf]
        %v250 = vld [vmem:[%s1 + $0x1c] sm:$0xf]
        %v251 = vld [vmem:[%s1 + $0x20] sm:$0xf]
        %v252 = vld [vmem:[%s1 + $0x24] sm:$0xf]
        %v253 = vld [vmem:[%s1 + $0x28] sm:$0xf]
        %v254 = vld [vmem:[%s1 + $0x2c] sm:$0xf]
        %v255 = vld [vmem:[%s1 + $0x30] sm:$0xf]
        %v256 = vld [vmem:[%s1 + $0x34] sm:$0xf]
        %v257 = vld [vmem:[%s1 + $0x38] sm:$0xf]
        %v258 = vld [vmem:[%s1 + $0x3c] sm:$0xf]
        %v259 = vld [vmem:[%s2] sm:$0x1]
        %v261 = vlaneseq
        %v262 = vshrl.u32 %v261, 7
        %v263 = vsub.s32 0, %v262
        %v264 = vrot.slane %v259, %v263
        %v282 = vunpack.c.l.b16 %v243
        %v283 = vunpack.c.l.b16 %v244
        %v284 = vunpack.c.l.b16 %v245
        %v285 = vunpack.c.l.b16 %v246
        %v286 = vunpack.c.l.b16 %v247
        %v287 = vunpack.c.l.b16 %v248
        %v288 = vunpack.c.l.b16 %v249
        %v289 = vunpack.c.l.b16 %v250
        %v290 = vunpack.c.l.b16 %v251
        %v291 = vunpack.c.l.b16 %v252
        %v292 = vunpack.c.l.b16 %v253
        %v293 = vunpack.c.l.b16 %v254
        %v294 = vunpack.c.l.b16 %v255
        %v295 = vunpack.c.l.b16 %v256
        %v296 = vunpack.c.l.b16 %v257
        %v297 = vunpack.c.l.b16 %v258
        %v298 = vpack.c.b16 %v283, %v282
        %v299 = vpack.c.b16 %v285, %v284
        %v300 = vpack.c.b16 %v287, %v286
        %v301 = vpack.c.b16 %v289, %v288
        %v302 = vpack.c.b16 %v291, %v290
        %v303 = vpack.c.b16 %v293, %v292
        %v304 = vpack.c.b16 %v295, %v294
        %v305 = vpack.c.b16 %v297, %v296
        %314 = vmatprep.subr.bf16.mxu0 0
        %315 = vmatpush1.bf16.msra.mxu0 %v298
        %316 = vmatprep.subr.bf16.mxu0 0
        %317 = vmatpush1.bf16.msra.mxu0 %v299
        %318 = vmatprep.subr.bf16.mxu0 0
        %319 = vmatpush1.bf16.msra.mxu0 %v300
        %320 = vmatprep.subr.bf16.mxu0 0
        %321 = vmatpush1.bf16.msra.mxu0 %v301
        %322 = vmatprep.subr.bf16.mxu0 0
        %323 = vmatpush1.bf16.msra.mxu0 %v302
        %324 = vmatprep.subr.bf16.mxu0 0
        %325 = vmatpush1.bf16.msra.mxu0 %v303
        %326 = vmatprep.subr.bf16.mxu0 0
        %327 = vmatpush1.bf16.msra.mxu0 %v304
        %328 = vmatprep.subr.bf16.mxu0 0
        %329 = vmatpush1.bf16.msra.mxu0 %v305
        %330 = vmatprep.subr.bf16.mxu0 0
        %331 = vmatpush1.bf16.msra.mxu0 0
        %332 = vmatprep.subr.bf16.mxu0 0
        %333 = vmatpush1.bf16.msra.mxu0 0
        %334 = vmatprep.subr.bf16.mxu0 0
        %335 = vmatpush1.bf16.msra.mxu0 0
        %336 = vmatprep.subr.bf16.mxu0 0
        %337 = vmatpush1.bf16.msra.mxu0 0
        %338 = vmatprep.subr.bf16.mxu0 0
        %339 = vmatpush1.bf16.msra.mxu0 0
        %340 = vmatprep.subr.bf16.mxu0 0
        %341 = vmatpush1.bf16.msra.mxu0 0
        %342 = vmatprep.subr.bf16.mxu0 0
        %343 = vmatpush1.bf16.msra.mxu0 0
        %344 = vmatprep.subr.bf16.mxu0 0
        %345 = vmatpush1.bf16.msra.mxu0 0
        %346 = vmatprep.mubr.bf16.mxu0 0
        %347 = vmatmul.mubr.bf16.gmra.mrb[0].mxu0 %v242
        %v348 = vpop.f32.mrb[0].mxu0
        %v349 = vadd.f32 %v264, %v348
        %v350 = vpop.f32.mrb[0].mxu0
        %v351 = vpop.f32.mrb[0].mxu0
        %v352 = vpop.f32.mrb[0].mxu0
        %353 = vdwg.mxu0
        %v354 = vmax.f32 %v349, 0.0
        %v355 = vpack.c.bf16 %v354, %v354
        %v356 = vld [vmem:[%s3] sm:$0xf]
        %v357 = vld [vmem:[%s3 + $0x4] sm:$0xf]
        %v358 = vld [vmem:[%s3 + $0x8] sm:$0xf]
        %v359 = vld [vmem:[%s3 + $0xc] sm:$0xf]
        %v360 = vld [vmem:[%s3 + $0x10] sm:$0xf]
        %v361 = vld [vmem:[%s3 + $0x14] sm:$0xf]
        %v362 = vld [vmem:[%s3 + $0x18] sm:$0xf]
        %v363 = vld [vmem:[%s3 + $0x1c] sm:$0xf]
        %v364 = vld [vmem:[%s3 + $0x20] sm:$0xf]
        %v365 = vld [vmem:[%s3 + $0x24] sm:$0xf]
        %v366 = vld [vmem:[%s3 + $0x28] sm:$0xf]
        %v367 = vld [vmem:[%s3 + $0x2c] sm:$0xf]
        %v368 = vld [vmem:[%s3 + $0x30] sm:$0xf]
        %v369 = vld [vmem:[%s3 + $0x34] sm:$0xf]
        %v370 = vld [vmem:[%s3 + $0x38] sm:$0xf]
        %v371 = vld [vmem:[%s3 + $0x3c] sm:$0xf]
        %v372 = vld [vmem:[%s4] sm:$0x1]
        %v374 = vlaneseq
        %v375 = vshrl.u32 %v374, 7
        %v376 = vsub.s32 0, %v375
        %v377 = vrot.slane %v372, %v376
        %v395 = vunpack.c.l.b16 %v356
        %v396 = vunpack.c.l.b16 %v357
        %v397 = vunpack.c.l.b16 %v358
        %v398 = vunpack.c.l.b16 %v359
        %v399 = vunpack.c.l.b16 %v360
        %v400 = vunpack.c.l.b16 %v361
        %v401 = vunpack.c.l.b16 %v362
        %v402 = vunpack.c.l.b16 %v363
        %v403 = vunpack.c.l.b16 %v364
        %v404 = vunpack.c.l.b16 %v365
        %v405 = vunpack.c.l.b16 %v366
        %v406 = vunpack.c.l.b16 %v367
        %v407 = vunpack.c.l.b16 %v368
        %v408 = vunpack.c.l.b16 %v369
        %v409 = vunpack.c.l.b16 %v370
        %v410 = vunpack.c.l.b16 %v371
        %v411 = vpack.c.b16 %v396, %v395
        %v412 = vpack.c.b16 %v398, %v397
        %v413 = vpack.c.b16 %v400, %v399
        %v414 = vpack.c.b16 %v402, %v401
        %v415 = vpack.c.b16 %v404, %v403
        %v416 = vpack.c.b16 %v406, %v405
        %v417 = vpack.c.b16 %v408, %v407
        %v418 = vpack.c.b16 %v410, %v409
        %427 = vmatprep.subr.bf16.mxu0 0
        %428 = vmatpush1.bf16.msra.mxu0 %v411
        %429 = vmatprep.subr.bf16.mxu0 0
        %430 = vmatpush1.bf16.msra.mxu0 %v412
        %431 = vmatprep.subr.bf16.mxu0 0
        %432 = vmatpush1.bf16.msra.mxu0 %v413
        %433 = vmatprep.subr.bf16.mxu0 0
        %434 = vmatpush1.bf16.msra.mxu0 %v414
        %435 = vmatprep.subr.bf16.mxu0 0
        %436 = vmatpush1.bf16.msra.mxu0 %v415
        %437 = vmatprep.subr.bf16.mxu0 0
        %438 = vmatpush1.bf16.msra.mxu0 %v416
        %439 = vmatprep.subr.bf16.mxu0 0
        %440 = vmatpush1.bf16.msra.mxu0 %v417
        %441 = vmatprep.subr.bf16.mxu0 0
        %442 = vmatpush1.bf16.msra.mxu0 %v418
        %443 = vmatprep.subr.bf16.mxu0 0
        %444 = vmatpush1.bf16.msra.mxu0 0
        %445 = vmatprep.subr.bf16.mxu0 0
        %446 = vmatpush1.bf16.msra.mxu0 0
        %447 = vmatprep.subr.bf16.mxu0 0
        %448 = vmatpush1.bf16.msra.mxu0 0
        %449 = vmatprep.subr.bf16.mxu0 0
        %450 = vmatpush1.bf16.msra.mxu0 0
        %451 = vmatprep.subr.bf16.mxu0 0
        %452 = vmatpush1.bf16.msra.mxu0 0
        %453 = vmatprep.subr.bf16.mxu0 0
        %454 = vmatpush1.bf16.msra.mxu0 0
        %455 = vmatprep.subr.bf16.mxu0 0
        %456 = vmatpush1.bf16.msra.mxu0 0
        %457 = vmatprep.subr.bf16.mxu0 0
        %458 = vmatpush1.bf16.msra.mxu0 0
        %459 = vmatprep.mubr.bf16.mxu0 0
        %460 = vmatmul.mubr.bf16.gmra.mrb[0].mxu0 %v355
        %v461 = vpop.f32.mrb[0].mxu0
        %v462 = vadd.f32 %v377, %v461
        %v463 = vpop.f32.mrb[0].mxu0
        %v464 = vpop.f32.mrb[0].mxu0
        %v465 = vpop.f32.mrb[0].mxu0
        %466 = vdwg.mxu0
        %vm467 = vcmask 130048
        %468 = vst.msk [vmem:[%s239] sm:$0xff] %vm467, %v462
        %s469 = sand.u32 %s140, 1
        %s470 = scalar_lea.sflag [#allocation4], %s469
        %s471 = sand.u32 %s140, 1
        %s472 = smul.addr %s471, 8
        %s473 = scalar_lea.vmem [#allocation5], %s472
        // Predicated region
        $region45: #{tpu_custom_call.1} parent=39 // pred_check
          %p474 = pneg %p150
        $region46: #{tpu_custom_call.1} parent=39 // pred_check_branch
          %476 = sbr.rel (%p474) target = $region48
        $region47: #{tpu_custom_call.1} parent=39 // pred_region
          %s478 = ssub.s32 128, 128
          %479 = vsyncadd %s470, %s478
          %s480 = smul.addr %s22, 128
          %s481 = scalar_lea.hbm %s5, %s480
          %s483 = sshll.u32 %s473, 4
          %s484 = int_to_ptr.vmem [resolvable:$true] %s483
          %486 = dma.vmem_to_hbm [thread:$0]  %s484, 128, %s481, %s470
        $region48: #{tpu_custom_call.1} parent=39 // pred_fallthru
          _
      $region40: #{tpu_custom_call.1} parent=5 // pred_fallthru
        _
      %p487 = scmp.le.s32.totalorder 2, %s17
      // Predicated region
      $region49: #{tpu_custom_call.1} parent=5 // pred_check
        %p488 = pneg %p487
      $region50: #{tpu_custom_call.1} parent=5 // pred_check_branch
        %490 = sbr.rel (%p488) target = $region52
      $region51: #{tpu_custom_call.1} parent=5 // pred_region
        %s491 = ssub.s32 %s17, 2
        // Predicated region
        $region53: #{tpu_custom_call.1} parent=51 // pred_check
          %p492 = pneg %p156
        $region54: #{tpu_custom_call.1} parent=51 // pred_check_branch
          %494 = sbr.rel (%p492) target = $region56
        $region55: #{tpu_custom_call.1} parent=51 // pred_region
          %s495 = sand.u32 %s141, 1
          %s496 = scalar_lea.sflag [#allocation4], %s495
          %s497 = sand.u32 %s141, 1
          %s498 = smul.addr %s497, 8
          %s499 = scalar_lea.vmem [#allocation5], %s498
          %500 = dma.done %s496, 128
        $region56: #{tpu_custom_call.1} parent=51 // pred_fallthru
          _
      $region52: #{tpu_custom_call.1} parent=5 // pred_fallthru
        _
    $region6: #{tpu_custom_call.1} parent=1 // loop_footer
      %s21 = sadd.s32 1, %s17
    $region7: #{tpu_custom_call.1} parent=1 // loop_footer_branch
      %16 = sbr.rel target = $region3
    $region8: #{tpu_custom_call.1} parent=1 // loop_exit
      _
    %501 = vsyncpa [#allocation3], 1
    %s502 = scalar_lea.sflag [#allocation3], 1
    %503 = vsyncpa %s502, 1
    %504 = vsyncpa [#allocation4], 1
    %s505 = scalar_lea.sflag [#allocation4], 1
    %506 = vsyncpa %s505, 1

</llo_original>
